<compile_context>
chip_gen: v5e
topology: v5e:2x2
jax: 0.10.0
libtpu: 0.0.40
codegen_flags: <defaults>
</compile_context>

<pallas_src>
import functools

import jax
import jax.numpy as jnp
from jax.experimental import pallas as pl
from jax.experimental.pallas import tpu as pltpu

LANE = 128
FUSED_MAX_NPAD = 2048                     # bf16 A_hat (<= 8 MiB) fully VMEM-resident
VMEM_LIMIT_BYTES = 40 * 1024 * 1024       # explicit: v5e scoped default is 16 MiB


def _round_up(x, m):
    return (x + m - 1) // m * m


def _choose_tiled(n_pad):
    """Large-graph tiling: tm=512 rows, widest tk in {2048,1536,1024,512} dividing n_pad."""
    tm = 512
    for tk in (2048, 1536, 1024, 512):
        if n_pad % tk == 0:
            return tm, tk
    return tm, 512


# ----------------------------- adjacency -------------------------------------

def _normalized_adjacency_f32(edge_index, num_nodes, n_pad):
    """Dense D^{-1/2}(A+I)D^{-1/2} (torch_geometric gcn_norm defaults),
    scatter-built directly at padded size (padded rows/cols stay zero)."""
    src, dst = edge_index[0], edge_index[1]
    loops = jnp.arange(num_nodes, dtype=edge_index.dtype)
    src = jnp.concatenate([src, loops])
    dst = jnp.concatenate([dst, loops])
    ew = jnp.ones_like(src, dtype=jnp.float32)
    deg = jnp.zeros((num_nodes,), jnp.float32).at[dst].add(ew)
    deg_inv_sqrt = jnp.where(deg > 0, 1.0 / jnp.sqrt(deg), 0.0)
    norm = deg_inv_sqrt[src] * ew * deg_inv_sqrt[dst]
    # aggregation out[dst] += norm * x[src]  =>  A_hat[dst, src] = norm
    return jnp.zeros((n_pad, n_pad), jnp.float32).at[dst, src].add(norm)


# ----------------------------- kernels ----------------------------------------

def gcn_fused_kernel(adj_ref, xw_ref, b1_ref, w2_ref, b2_ref, out_ref):
    """Both GCN layers in one shot; every operand is VMEM-resident.

      H1  = relu(A_hat @ (X W1) + b1)            (dropout = identity, eval mode)
      G   = H1 @ W2                              (W2 folded here)
      OUT = A_hat @ G + b2
    """
    agg1 = jnp.dot(adj_ref[...], xw_ref[...], preferred_element_type=jnp.float32)
    h1 = jnp.maximum(agg1 + b1_ref[...], 0.0).astype(jnp.bfloat16)
    g = jnp.dot(h1, w2_ref[...], preferred_element_type=jnp.float32).astype(jnp.bfloat16)
    out = jnp.dot(adj_ref[...], g, preferred_element_type=jnp.float32) + b2_ref[...]
    out_ref[...] = out.astype(out_ref.dtype)


def gcn_layer1_kernel(adj_ref, xw_ref, b1_ref, w2_ref, g_ref, acc_ref, *, tk):
    """G tile = relu( sum_k adj[i,k] @ (X W1)[k,:] + b1 ) @ W2  (W2 folded at finalize).

    xw_ref is the full (n_pad, h_pad) slab, VMEM-resident (constant block index);
    the current contraction chunk is sliced inside the kernel.
    """
    k = pl.program_id(1)

    @pl.when(k == 0)
    def _():
        acc_ref[...] = jnp.zeros_like(acc_ref)

    k_off = pl.multiple_of(k * tk, tk)
    acc_ref[...] += jnp.dot(adj_ref[...], xw_ref[pl.ds(k_off, tk), :],
                            preferred_element_type=jnp.float32)

    @pl.when(k == pl.num_programs(1) - 1)
    def _():
        h1 = jnp.maximum(acc_ref[...] + b1_ref[...], 0.0).astype(jnp.bfloat16)
        g = jnp.dot(h1, w2_ref[...], preferred_element_type=jnp.float32)
        g_ref[...] = g.astype(g_ref.dtype)


def gcn_layer2_kernel(adj_ref, g_ref, b2_ref, out_ref, acc_ref, *, tk):
    """OUT tile = sum_k adj[i,k] @ G[k,:] + b2 (pure aggregation; W2 already folded)."""
    k = pl.program_id(1)

    @pl.when(k == 0)
    def _():
        acc_ref[...] = jnp.zeros_like(acc_ref)

    k_off = pl.multiple_of(k * tk, tk)
    acc_ref[...] += jnp.dot(adj_ref[...], g_ref[pl.ds(k_off, tk), :],
                            preferred_element_type=jnp.float32)

    @pl.when(k == pl.num_programs(1) - 1)
    def _():
        out_ref[...] = (acc_ref[...] + b2_ref[...]).astype(out_ref.dtype)


# ----------------------------- wrapper ----------------------------------------

@jax.jit
def gcn_forward(x, edge_index, w1, b1, w2, b2):
    n, f_in = x.shape
    hidden = w1.shape[1]
    f_out = w2.shape[1]

    h_pad = _round_up(hidden, LANE)
    o_pad = _round_up(f_out, LANE)

    fused = _round_up(n, LANE) <= FUSED_MAX_NPAD
    n_pad = _round_up(n, LANE) if fused else _round_up(n, 512)

    # Padded, bf16 normalized adjacency, built in one pass.
    adj_p = _normalized_adjacency_f32(edge_index, n, n_pad).astype(jnp.bfloat16)

    # Hoisted feature transform (K = f_in is tiny; would waste the MXU in-loop).
    xw1 = jnp.dot(x, w1, preferred_element_type=jnp.float32)          # (n, hidden)
    xw1_p = jnp.zeros((n_pad, h_pad), jnp.bfloat16)
    xw1_p = xw1_p.at[:n, :hidden].set(xw1.astype(jnp.bfloat16))

    b1_p = jnp.zeros((1, h_pad), jnp.float32).at[0, :hidden].set(b1)
    w2_p = jnp.zeros((h_pad, o_pad), jnp.bfloat16).at[:hidden, :f_out].set(
        w2.astype(jnp.bfloat16))
    b2_p = jnp.zeros((1, o_pad), jnp.float32).at[0, :f_out].set(b2)

    if fused:
        # ---- single fused call: A_hat streamed from HBM exactly once --------
        out_p = pl.pallas_call(
            gcn_fused_kernel,
            out_shape=jax.ShapeDtypeStruct((n_pad, o_pad), jnp.float32),
            grid_spec=pltpu.PrefetchScalarGridSpec(
                num_scalar_prefetch=0,
                grid=(1,),
                in_specs=[
                    pl.BlockSpec((n_pad, n_pad), lambda i: (0, 0)),   # A_hat
                    pl.BlockSpec((n_pad, h_pad), lambda i: (0, 0)),   # X W1
                    pl.BlockSpec((1, h_pad), lambda i: (0, 0)),       # b1
                    pl.BlockSpec((h_pad, o_pad), lambda i: (0, 0)),   # W2
                    pl.BlockSpec((1, o_pad), lambda i: (0, 0)),       # b2
                ],
                out_specs=pl.BlockSpec((n_pad, o_pad), lambda i: (0, 0)),
            ),
            compiler_params=pltpu.CompilerParams(
                dimension_semantics=("arbitrary",),
                vmem_limit_bytes=VMEM_LIMIT_BYTES),
            cost_estimate=pl.CostEstimate(
                flops=2 * n_pad * n_pad * (h_pad + o_pad)
                + 2 * n_pad * h_pad * o_pad,
                transcendentals=0,
                bytes_accessed=adj_p.size * 2 + xw1_p.size * 2
                + w2_p.size * 2 + n_pad * o_pad * 4),
        )(adj_p, xw1_p, b1_p, w2_p, b2_p)
        return out_p[:n, :f_out]

    # ---- large-graph path: two tiled calls, resident feature slabs ----------
    tm, tk = _choose_tiled(n_pad)
    grid = (n_pad // tm, n_pad // tk)
    mosaic_params = pltpu.CompilerParams(
        dimension_semantics=("parallel", "arbitrary"),
        vmem_limit_bytes=VMEM_LIMIT_BYTES)

    # layer 1 (+ folded W2): G = relu(A_hat @ (X W1) + b1) @ W2
    g_p = pl.pallas_call(
        functools.partial(gcn_layer1_kernel, tk=tk),
        out_shape=jax.ShapeDtypeStruct((n_pad, o_pad), jnp.bfloat16),
        grid_spec=pltpu.PrefetchScalarGridSpec(
            num_scalar_prefetch=0,
            grid=grid,
            in_specs=[
                pl.BlockSpec((tm, tk), lambda i, k: (i, k)),          # adj tile
                pl.BlockSpec((n_pad, h_pad), lambda i, k: (0, 0)),    # X W1 (resident)
                pl.BlockSpec((1, h_pad), lambda i, k: (0, 0)),        # b1
                pl.BlockSpec((h_pad, o_pad), lambda i, k: (0, 0)),    # W2
            ],
            out_specs=pl.BlockSpec((tm, o_pad), lambda i, k: (i, 0)),
            scratch_shapes=[pltpu.VMEM((tm, h_pad), jnp.float32)],
        ),
        compiler_params=mosaic_params,
        cost_estimate=pl.CostEstimate(
            flops=2 * n_pad * n_pad * h_pad + 2 * n_pad * h_pad * o_pad,
            transcendentals=0,
            bytes_accessed=adj_p.size * 2 + xw1_p.size * 2
            + w2_p.size * 2 + n_pad * o_pad * 2),
    )(adj_p, xw1_p, b1_p, w2_p)

    # layer 2: OUT = A_hat @ G + b2
    out_p = pl.pallas_call(
        functools.partial(gcn_layer2_kernel, tk=tk),
        out_shape=jax.ShapeDtypeStruct((n_pad, o_pad), jnp.float32),
        grid_spec=pltpu.PrefetchScalarGridSpec(
            num_scalar_prefetch=0,
            grid=grid,
            in_specs=[
                pl.BlockSpec((tm, tk), lambda i, k: (i, k)),          # adj tile
                pl.BlockSpec((n_pad, o_pad), lambda i, k: (0, 0)),    # G (resident)
                pl.BlockSpec((1, o_pad), lambda i, k: (0, 0)),        # b2
            ],
            out_specs=pl.BlockSpec((tm, o_pad), lambda i, k: (i, 0)),
            scratch_shapes=[pltpu.VMEM((tm, o_pad), jnp.float32)],
        ),
        compiler_params=mosaic_params,
        cost_estimate=pl.CostEstimate(
            flops=2 * n_pad * n_pad * o_pad,
            transcendentals=0,
            bytes_accessed=adj_p.size * 2 + g_p.size * 2 + n_pad * o_pad * 4),
    )(adj_p, g_p, b2_p)

    return out_p[:n, :f_out]


# ----------------------------- references -------------------------------------

def reference_forward(x, edge_index, w1, b1, w2, b2):
    """Pure-JAX f32 reference for the module's forward semantics."""
    n = x.shape[0]
    adj = _normalized_adjacency_f32(edge_index, n, n)
    h = adj @ (x @ w1) + b1
    h = jnp.maximum(h, 0.0)
    return adj @ (h @ w2) + b2


def reference_forward_bf16(x, edge_index, w1, b1, w2, b2):
    """Reference with the exact bf16 quantization points the kernel path uses."""
    n = x.shape[0]
    adj = _normalized_adjacency_f32(edge_index, n, n).astype(jnp.bfloat16)
    xw1 = jnp.dot(x, w1, preferred_element_type=jnp.float32).astype(jnp.bfloat16)
    h1 = jnp.maximum(
        jnp.dot(adj, xw1, preferred_element_type=jnp.float32) + b1, 0.0
    ).astype(jnp.bfloat16)
    g = jnp.dot(h1, w2.astype(jnp.bfloat16),
                preferred_element_type=jnp.float32).astype(jnp.bfloat16)
    return jnp.dot(adj, g, preferred_element_type=jnp.float32) + b2


# ----------------------------- test --------------------------------------------

def _run_case(num_nodes, num_node_features, hidden, num_edges, seed):
    key = jax.random.PRNGKey(seed)
    k_x, k_e, k_w1, k_b1, k_w2, k_b2 = jax.random.split(key, 6)

    x = jax.random.normal(k_x, (num_nodes, num_node_features), dtype=jnp.float32)
    edge_index = jax.random.randint(k_e, (2, num_edges), 0, num_nodes, dtype=jnp.int32)

    limit1 = (6.0 / (num_node_features + hidden)) ** 0.5
    limit2 = (6.0 / (hidden + num_node_features)) ** 0.5
    w1 = jax.random.uniform(k_w1, (num_node_features, hidden), jnp.float32, -limit1, limit1)
    w2 = jax.random.uniform(k_w2, (hidden, num_node_features), jnp.float32, -limit2, limit2)
    b1 = 0.1 * jax.random.normal(k_b1, (hidden,), jnp.float32)
    b2 = 0.1 * jax.random.normal(k_b2, (num_node_features,), jnp.float32)

    out = jax.block_until_ready(gcn_forward(x, edge_index, w1, b1, w2, b2))
    assert out.shape == (num_nodes, num_node_features)
    assert out.dtype == jnp.float32

    ref_bf16 = reference_forward_bf16(x, edge_index, w1, b1, w2, b2)
    ref_f32 = reference_forward(x, edge_index, w1, b1, w2, b2)

    err_bf16 = float(jnp.max(jnp.abs(out - ref_bf16)))
    err_f32 = float(jnp.max(jnp.abs(out - ref_f32)))
    # Tight check vs a reference with identical bf16 quantization (validates kernel
    # math / tiling); loose check vs the f32 module semantics (bf16 cast error).
    assert jnp.allclose(out, ref_bf16, atol=2e-3, rtol=2e-3), f"bf16-ref diff {err_bf16}"
    assert jnp.allclose(out, ref_f32, atol=1e-1, rtol=1e-1), f"f32-ref diff {err_f32}"


if __name__ == "__main__":
    # Shapes implied by the module: num_node_features features, hidden=16.
    _run_case(num_nodes=8, num_node_features=4, hidden=16, num_edges=16, seed=0)
    # A second (still fused-path) size exercising real padding (n_pad=256).
    _run_case(num_nodes=200, num_node_features=4, hidden=16, num_edges=600, seed=0)
    print("KERNEL_OK")
</pallas_src>

<mosaic_0001>
module attributes {stable_mosaic.version = 11 : i64} {
  func.func @gcn_fused_kernel(%arg0: i32, %arg1: memref<128x128xbf16, #tpu.memory_space<vmem>>, %arg2: memref<128x128xbf16, #tpu.memory_space<vmem>>, %arg3: memref<1x128xf32, #tpu.memory_space<vmem>>, %arg4: memref<128x128xbf16, #tpu.memory_space<vmem>>, %arg5: memref<1x128xf32, #tpu.memory_space<vmem>>, %arg6: memref<128x128xf32, #tpu.memory_space<vmem>>) attributes {dimension_semantics = [#tpu.dimension_semantics<arbitrary>], iteration_bounds = array<i64: 1>, scalar_prefetch = 0 : i64, scratch_operands = 0 : i64, tpu.core_type = #tpu.core_type<tc>, window_params = [{pipeline_mode = #tpu.pipeline_mode<synchronous>, transform_indices = @transform_0, window_bounds = array<i64: 128, 128>}, {pipeline_mode = #tpu.pipeline_mode<synchronous>, transform_indices = @transform_1, window_bounds = array<i64: 128, 128>}, {pipeline_mode = #tpu.pipeline_mode<synchronous>, transform_indices = @transform_2, window_bounds = array<i64: 1, 128>}, {pipeline_mode = #tpu.pipeline_mode<synchronous>, transform_indices = @transform_3, window_bounds = array<i64: 128, 128>}, {pipeline_mode = #tpu.pipeline_mode<synchronous>, transform_indices = @transform_4, window_bounds = array<i64: 1, 128>}, {pipeline_mode = #tpu.pipeline_mode<synchronous>, transform_indices = @transform_5, window_bounds = array<i64: 128, 128>}]} {
    %c0 = arith.constant 0 : index
    %c0_0 = arith.constant 0 : index
    %0 = vector.load %arg1[%c0, %c0_0] : memref<128x128xbf16, #tpu.memory_space<vmem>>, vector<128x128xbf16>
    %c0_1 = arith.constant 0 : index
    %c0_2 = arith.constant 0 : index
    %1 = vector.load %arg2[%c0_1, %c0_2] : memref<128x128xbf16, #tpu.memory_space<vmem>>, vector<128x128xbf16>
    %cst = arith.constant dense<0.000000e+00> : vector<128x128xf32>
    %2 = tpu.matmul %0, %1, %cst {dimension_numbers = #tpu.dot_dimension_numbers<[1], [0], [0], [1], [0, 0, 1, 1], [], []>} : vector<128x128xbf16>, vector<128x128xbf16>, vector<128x128xf32> -> vector<128x128xf32>
    %c0_3 = arith.constant 0 : index
    %c0_4 = arith.constant 0 : index
    %3 = vector.load %arg3[%c0_3, %c0_4] : memref<1x128xf32, #tpu.memory_space<vmem>>, vector<1x128xf32>
    %4 = vector.broadcast %3 : vector<1x128xf32> to vector<128x128xf32>
    %5 = arith.addf %2, %4 : vector<128x128xf32>
    %cst_5 = arith.constant 0.000000e+00 : f32
    %6 = vector.broadcast %cst_5 : f32 to vector<128x128xf32>
    %7 = arith.maximumf %5, %6 : vector<128x128xf32>
    %8 = arith.truncf %7 : vector<128x128xf32> to vector<128x128xbf16>
    %c0_6 = arith.constant 0 : index
    %c0_7 = arith.constant 0 : index
    %9 = vector.load %arg4[%c0_6, %c0_7] : memref<128x128xbf16, #tpu.memory_space<vmem>>, vector<128x128xbf16>
    %cst_8 = arith.constant dense<0.000000e+00> : vector<128x128xf32>
    %10 = tpu.matmul %8, %9, %cst_8 {dimension_numbers = #tpu.dot_dimension_numbers<[1], [0], [0], [1], [0, 0, 1, 1], [], []>} : vector<128x128xbf16>, vector<128x128xbf16>, vector<128x128xf32> -> vector<128x128xf32>
    %11 = arith.truncf %10 : vector<128x128xf32> to vector<128x128xbf16>
    %c0_9 = arith.constant 0 : index
    %c0_10 = arith.constant 0 : index
    %12 = vector.load %arg1[%c0_9, %c0_10] : memref<128x128xbf16, #tpu.memory_space<vmem>>, vector<128x128xbf16>
    %cst_11 = arith.constant dense<0.000000e+00> : vector<128x128xf32>
    %13 = tpu.matmul %12, %11, %cst_11 {dimension_numbers = #tpu.dot_dimension_numbers<[1], [0], [0], [1], [0, 0, 1, 1], [], []>} : vector<128x128xbf16>, vector<128x128xbf16>, vector<128x128xf32> -> vector<128x128xf32>
    %c0_12 = arith.constant 0 : index
    %c0_13 = arith.constant 0 : index
    %14 = vector.load %arg5[%c0_12, %c0_13] : memref<1x128xf32, #tpu.memory_space<vmem>>, vector<1x128xf32>
    %15 = vector.broadcast %14 : vector<1x128xf32> to vector<128x128xf32>
    %16 = arith.addf %13, %15 : vector<128x128xf32>
    %c0_14 = arith.constant 0 : index
    %c0_15 = arith.constant 0 : index
    %17 = vector.load %arg6[%c0_14, %c0_15] : memref<128x128xf32, #tpu.memory_space<vmem>>, vector<128x128xf32>
    tpu.vector_store %arg6[%c0_14, %c0_15], %16 {strides = array<i32>} : memref<128x128xf32, #tpu.memory_space<vmem>>, vector<128x128xf32>,
    return
  }
  func.func @transform_0(%arg0: i32) -> (i32, i32) {
    %c0_i32 = arith.constant 0 : i32
    %c0_i32_0 = arith.constant 0 : i32
    %c0_i32_1 = arith.constant 0 : i32
    return %c0_i32, %c0_i32_0 : i32, i32
  }
  func.func @transform_1(%arg0: i32) -> (i32, i32) {
    %c0_i32 = arith.constant 0 : i32
    %c0_i32_0 = arith.constant 0 : i32
    %c0_i32_1 = arith.constant 0 : i32
    return %c0_i32, %c0_i32_0 : i32, i32
  }
  func.func @transform_2(%arg0: i32) -> (i32, i32) {
    %c0_i32 = arith.constant 0 : i32
    %c0_i32_0 = arith.constant 0 : i32
    %c0_i32_1 = arith.constant 0 : i32
    return %c0_i32, %c0_i32_0 : i32, i32
  }
  func.func @transform_3(%arg0: i32) -> (i32, i32) {
    %c0_i32 = arith.constant 0 : i32
    %c0_i32_0 = arith.constant 0 : i32
    %c0_i32_1 = arith.constant 0 : i32
    return %c0_i32, %c0_i32_0 : i32, i32
  }
  func.func @transform_4(%arg0: i32) -> (i32, i32) {
    %c0_i32 = arith.constant 0 : i32
    %c0_i32_0 = arith.constant 0 : i32
    %c0_i32_1 = arith.constant 0 : i32
    return %c0_i32, %c0_i32_0 : i32, i32
  }
  func.func @transform_5(%arg0: i32) -> (i32, i32) {
    %c0_i32 = arith.constant 0 : i32
    %c0_i32_0 = arith.constant 0 : i32
    %c0_i32_1 = arith.constant 0 : i32
    return %c0_i32, %c0_i32_0 : i32, i32
  }
}

</mosaic_0001>

<llo_original>
// kernel: mul.1
$region0: #{mul.1}
  #allocation0 [shape = 's32[1]{0}', space=sflag, size = 0x4, scoped, tag = 'scoped memory for mul.1']
  %s0 = inlined_call_operand.vmem [shape: f32[24], index: 0, kind: input, shape index: {}]
  %s1 = inlined_call_operand.vmem [shape: f32[24], index: 1, kind: input, shape index: {}]
  %s2 = inlined_call_operand.vmem [shape: f32[24], index: 2, kind: output, shape index: {}]
  %v3 = vld [vmem:[%s0] sm:$0x1]
  %v4 = vld [vmem:[%s1] sm:$0x1]
  %5 = xla_tuple %v3, %v4
  %6 = xla_tuple %5
  %v7 = vmul.f32 %v3, %v4
  %8 = xla_tuple %v7
  %9 = vst [vmem:[%s2] sm:$0x1] %v7

// kernel: gcn_forward.1
$region0: #{gcn_forward.1}
  #allocation0 [shape = 'u32[]', space=smem, size = 0x4, offset = 0x4, fixed_abs, tag = 'smem constant byte address 0x4 - core index']
  #allocation1 [shape = 'u32[72,128]{1,0:T(1,128)}', space=vmem, size = 0x9000, scoped, tag = 'internal scratch']
  %s0 = inlined_call_operand.vmem [shape: bf16[128,128], index: 0, kind: input, shape index: {}]
  %s1 = inlined_call_operand.vmem [shape: bf16[128,128], index: 1, kind: input, shape index: {}]
  %s2 = inlined_call_operand.vmem [shape: f32[1,128], index: 2, kind: input, shape index: {}]
  %s3 = inlined_call_operand.vmem [shape: bf16[128,128], index: 3, kind: input, shape index: {}]
  %s4 = inlined_call_operand.vmem [shape: f32[1,128], index: 4, kind: input, shape index: {}]
  %s5 = inlined_call_operand.vmem [shape: f32[128,128], index: 5, kind: output, shape index: {}]
  %s6 = sld [smem:[#allocation0]]
  $region30: #{gcn_forward.1} parent=0
    _
  %s8 = ssub.s32 1, %s6
  %s9 = scalar_select 0, %s8, %s6
  // Predicated region
  $region2: #{gcn_forward.1} parent=0 // pred_check
    _
  $region3: #{gcn_forward.1} parent=0 // pred_check_branch
    %11 = sbr.rel (0) target = $region5
  $region4: #{gcn_forward.1} parent=0 // pred_region
    _
  $region5: #{gcn_forward.1} parent=0 // pred_fallthru
    _
  // Predicated region
  $region6: #{gcn_forward.1} parent=0 // pred_check
    _
  $region7: #{gcn_forward.1} parent=0 // pred_check_branch
    %13 = sbr.rel (0) target = $region9
  $region8: #{gcn_forward.1} parent=0 // pred_region
    _
  $region9: #{gcn_forward.1} parent=0 // pred_fallthru
    _
  // Predicated region
  $region10: #{gcn_forward.1} parent=0 // pred_check
    _
  $region11: #{gcn_forward.1} parent=0 // pred_check_branch
    %15 = sbr.rel (0) target = $region13
  $region12: #{gcn_forward.1} parent=0 // pred_region
    _
  $region13: #{gcn_forward.1} parent=0 // pred_fallthru
    _
  // Predicated region
  $region14: #{gcn_forward.1} parent=0 // pred_check
    _
  $region15: #{gcn_forward.1} parent=0 // pred_check_branch
    %17 = sbr.rel (0) target = $region17
  $region16: #{gcn_forward.1} parent=0 // pred_region
    _
  $region17: #{gcn_forward.1} parent=0 // pred_fallthru
    _
  // Predicated region
  $region18: #{gcn_forward.1} parent=0 // pred_check
    _
  $region19: #{gcn_forward.1} parent=0 // pred_check_branch
    %19 = sbr.rel (0) target = $region21
  $region20: #{gcn_forward.1} parent=0 // pred_region
    _
  $region21: #{gcn_forward.1} parent=0 // pred_fallthru
    _
  %v20 = vld [vmem:[%s0] sm:$0xf]
  %v21 = vld [vmem:[%s0 + $0x4] sm:$0xf]
  %v22 = vld [vmem:[%s0 + $0x8] sm:$0xf]
  %v23 = vld [vmem:[%s0 + $0xc] sm:$0xf]
  %v24 = vld [vmem:[%s0 + $0x10] sm:$0xf]
  %v25 = vld [vmem:[%s0 + $0x14] sm:$0xf]
  %v26 = vld [vmem:[%s0 + $0x18] sm:$0xf]
  %v27 = vld [vmem:[%s0 + $0x1c] sm:$0xf]
  %v28 = vld [vmem:[%s0 + $0x20] sm:$0xf]
  %v29 = vld [vmem:[%s0 + $0x24] sm:$0xf]
  %v30 = vld [vmem:[%s0 + $0x28] sm:$0xf]
  %v31 = vld [vmem:[%s0 + $0x2c] sm:$0xf]
  %v32 = vld [vmem:[%s0 + $0x30] sm:$0xf]
  %v33 = vld [vmem:[%s0 + $0x34] sm:$0xf]
  %v34 = vld [vmem:[%s0 + $0x38] sm:$0xf]
  %v35 = vld [vmem:[%s0 + $0x3c] sm:$0xf]
  %v36 = vld [vmem:[%s1] sm:$0xf]
  %v37 = vld [vmem:[%s1 + $0x4] sm:$0xf]
  %v38 = vld [vmem:[%s1 + $0x8] sm:$0xf]
  %v39 = vld [vmem:[%s1 + $0xc] sm:$0xf]
  %v40 = vld [vmem:[%s1 + $0x10] sm:$0xf]
  %v41 = vld [vmem:[%s1 + $0x14] sm:$0xf]
  %v42 = vld [vmem:[%s1 + $0x18] sm:$0xf]
  %v43 = vld [vmem:[%s1 + $0x1c] sm:$0xf]
  %v44 = vld [vmem:[%s1 + $0x20] sm:$0xf]
  %v45 = vld [vmem:[%s1 + $0x24] sm:$0xf]
  %v46 = vld [vmem:[%s1 + $0x28] sm:$0xf]
  %v47 = vld [vmem:[%s1 + $0x2c] sm:$0xf]
  %v48 = vld [vmem:[%s1 + $0x30] sm:$0xf]
  %v49 = vld [vmem:[%s1 + $0x34] sm:$0xf]
  %v50 = vld [vmem:[%s1 + $0x38] sm:$0xf]
  %v51 = vld [vmem:[%s1 + $0x3c] sm:$0xf]
  %v52 = vld [vmem:[%s2] sm:$0x1]
  %v54 = vperm.slane %v52, 0
  %v72 = vunpack.c.l.b16 %v20
  %v73 = vunpack.c.l.b16 %v21
  %v74 = vunpack.c.l.b16 %v22
  %v75 = vunpack.c.l.b16 %v23
  %v76 = vunpack.c.l.b16 %v24
  %v77 = vunpack.c.l.b16 %v25
  %v78 = vunpack.c.l.b16 %v26
  %v79 = vunpack.c.l.b16 %v27
  %v80 = vunpack.c.l.b16 %v28
  %v81 = vunpack.c.l.b16 %v29
  %v82 = vunpack.c.l.b16 %v30
  %v83 = vunpack.c.l.b16 %v31
  %v84 = vunpack.c.l.b16 %v32
  %v85 = vunpack.c.l.b16 %v33
  %v86 = vunpack.c.l.b16 %v34
  %v87 = vunpack.c.l.b16 %v35
  %v88 = vpack.c.b16 %v73, %v72
  %v89 = vpack.c.b16 %v75, %v74
  %v90 = vpack.c.b16 %v77, %v76
  %v91 = vpack.c.b16 %v79, %v78
  %v92 = vpack.c.b16 %v81, %v80
  %v93 = vpack.c.b16 %v83, %v82
  %v94 = vpack.c.b16 %v85, %v84
  %v95 = vpack.c.b16 %v87, %v86
  %v120 = vunpack.c.l.b16 %v36
  %v121 = vunpack.c.l.b16 %v37
  %v122 = vunpack.c.l.b16 %v38
  %v123 = vunpack.c.l.b16 %v39
  %v124 = vunpack.c.l.b16 %v40
  %v125 = vunpack.c.l.b16 %v41
  %v126 = vunpack.c.l.b16 %v42
  %v127 = vunpack.c.l.b16 %v43
  %v128 = vunpack.c.l.b16 %v44
  %v129 = vunpack.c.l.b16 %v45
  %v130 = vunpack.c.l.b16 %v46
  %v131 = vunpack.c.l.b16 %v47
  %v132 = vunpack.c.l.b16 %v48
  %v133 = vunpack.c.l.b16 %v49
  %v134 = vunpack.c.l.b16 %v50
  %v135 = vunpack.c.l.b16 %v51
  %v136 = vpack.c.b16 %v121, %v120
  %v137 = vpack.c.b16 %v123, %v122
  %v138 = vpack.c.b16 %v125, %v124
  %v139 = vpack.c.b16 %v127, %v126
  %v140 = vpack.c.b16 %v129, %v128
  %v141 = vpack.c.b16 %v131, %v130
  %v142 = vpack.c.b16 %v133, %v132
  %v143 = vpack.c.b16 %v135, %v134
  %152 = vmatpush.bf16.msra.mxu0 %v143
  %153 = vmatpush.bf16.msra.mxu0 %v142
  %154 = vmatpush.bf16.msra.mxu0 %v141
  %155 = vmatpush.bf16.msra.mxu0 %v140
  %156 = vmatpush.bf16.msra.mxu0 %v139
  %157 = vmatpush.bf16.msra.mxu0 %v138
  %158 = vmatpush.bf16.msra.mxu0 %v137
  %159 = vmatpush.bf16.msra.mxu0 %v136
  %160 = vmatmul.bf16.gmra.mxu0 %v88
  %v161 = vpop.f32.mrf.mxu0
  %v162 = vadd.f32 %v54, %v161
  %v163 = vpop.f32.mrf.mxu0
  %v164 = vadd.f32 %v54, %v163
  %165 = vmatmul.bf16.gmra.mxu0 %v89
  %v166 = vpop.f32.mrf.mxu0
  %v167 = vadd.f32 %v54, %v166
  %v168 = vpop.f32.mrf.mxu0
  %v169 = vadd.f32 %v54, %v168
  %170 = vmatmul.bf16.gmra.mxu0 %v90
  %v171 = vpop.f32.mrf.mxu0
  %v172 = vadd.f32 %v54, %v171
  %v173 = vpop.f32.mrf.mxu0
  %v174 = vadd.f32 %v54, %v173
  %175 = vmatmul.bf16.gmra.mxu0 %v91
  %v176 = vpop.f32.mrf.mxu0
  %v177 = vadd.f32 %v54, %v176
  %v178 = vpop.f32.mrf.mxu0
  %v179 = vadd.f32 %v54, %v178
  %180 = vmatmul.bf16.gmra.mxu0 %v92
  %v181 = vpop.f32.mrf.mxu0
  %v182 = vadd.f32 %v54, %v181
  %v183 = vpop.f32.mrf.mxu0
  %v184 = vadd.f32 %v54, %v183
  %185 = vmatmul.bf16.gmra.mxu0 %v93
  %v186 = vpop.f32.mrf.mxu0
  %v187 = vadd.f32 %v54, %v186
  %v188 = vpop.f32.mrf.mxu0
  %v189 = vadd.f32 %v54, %v188
  %190 = vmatmul.bf16.gmra.mxu0 %v94
  %v191 = vpop.f32.mrf.mxu0
  %v192 = vadd.f32 %v54, %v191
  %v193 = vpop.f32.mrf.mxu0
  %v194 = vadd.f32 %v54, %v193
  %195 = vmatmul.bf16.gmra.mxu0 %v95
  %v196 = vpop.f32.mrf.mxu0
  %v197 = vadd.f32 %v54, %v196
  %v198 = vpop.f32.mrf.mxu0
  %v199 = vadd.f32 %v54, %v198
  %200 = vdwg.mxu0
  %v201 = vmax.f32 %v162, 0.0
  %v202 = vmax.f32 %v164, 0.0
  %v203 = vmax.f32 %v167, 0.0
  %v204 = vmax.f32 %v169, 0.0
  %v205 = vmax.f32 %v172, 0.0
  %v206 = vmax.f32 %v174, 0.0
  %v207 = vmax.f32 %v177, 0.0
  %v208 = vmax.f32 %v179, 0.0
  %v209 = vmax.f32 %v182, 0.0
  %v210 = vmax.f32 %v184, 0.0
  %v211 = vmax.f32 %v187, 0.0
  %v212 = vmax.f32 %v189, 0.0
  %v213 = vmax.f32 %v192, 0.0
  %v214 = vmax.f32 %v194, 0.0
  %v215 = vmax.f32 %v197, 0.0
  %v216 = vmax.f32 %v199, 0.0
  %v217 = vpack.c.bf16 %v202, %v201
  %v218 = vpack.c.bf16 %v204, %v203
  %v219 = vpack.c.bf16 %v206, %v205
  %v220 = vpack.c.bf16 %v208, %v207
  %v221 = vpack.c.bf16 %v210, %v209
  %v222 = vpack.c.bf16 %v212, %v211
  %v223 = vpack.c.bf16 %v214, %v213
  %v224 = vpack.c.bf16 %v216, %v215
  %v225 = vld [vmem:[%s3] sm:$0xf]
  %v226 = vld [vmem:[%s3 + $0x4] sm:$0xf]
  %v227 = vld [vmem:[%s3 + $0x8] sm:$0xf]
  %v228 = vld [vmem:[%s3 + $0xc] sm:$0xf]
  %v229 = vld [vmem:[%s3 + $0x10] sm:$0xf]
  %v230 = vld [vmem:[%s3 + $0x14] sm:$0xf]
  %v231 = vld [vmem:[%s3 + $0x18] sm:$0xf]
  %v232 = vld [vmem:[%s3 + $0x1c] sm:$0xf]
  %v233 = vld [vmem:[%s3 + $0x20] sm:$0xf]
  %v234 = vld [vmem:[%s3 + $0x24] sm:$0xf]
  %v235 = vld [vmem:[%s3 + $0x28] sm:$0xf]
  %v236 = vld [vmem:[%s3 + $0x2c] sm:$0xf]
  %v237 = vld [vmem:[%s3 + $0x30] sm:$0xf]
  %v238 = vld [vmem:[%s3 + $0x34] sm:$0xf]
  %v239 = vld [vmem:[%s3 + $0x38] sm:$0xf]
  %v240 = vld [vmem:[%s3 + $0x3c] sm:$0xf]
  %v257 = vunpack.c.l.b16 %v225
  %v258 = vunpack.c.l.b16 %v226
  %v259 = vunpack.c.l.b16 %v227
  %v260 = vunpack.c.l.b16 %v228
  %v261 = vunpack.c.l.b16 %v229
  %v262 = vunpack.c.l.b16 %v230
  %v263 = vunpack.c.l.b16 %v231
  %v264 = vunpack.c.l.b16 %v232
  %v265 = vunpack.c.l.b16 %v233
  %v266 = vunpack.c.l.b16 %v234
  %v267 = vunpack.c.l.b16 %v235
  %v268 = vunpack.c.l.b16 %v236
  %v269 = vunpack.c.l.b16 %v237
  %v270 = vunpack.c.l.b16 %v238
  %v271 = vunpack.c.l.b16 %v239
  %v272 = vunpack.c.l.b16 %v240
  %v273 = vpack.c.b16 %v258, %v257
  %v274 = vpack.c.b16 %v260, %v259
  %v275 = vpack.c.b16 %v262, %v261
  %v276 = vpack.c.b16 %v264, %v263
  %v277 = vpack.c.b16 %v266, %v265
  %v278 = vpack.c.b16 %v268, %v267
  %v279 = vpack.c.b16 %v270, %v269
  %v280 = vpack.c.b16 %v272, %v271
  %289 = vmatpush.bf16.msra.mxu0 %v280
  %290 = vmatpush.bf16.msra.mxu0 %v279
  %291 = vmatpush.bf16.msra.mxu0 %v278
  %292 = vmatpush.bf16.msra.mxu0 %v277
  %293 = vmatpush.bf16.msra.mxu0 %v276
  %294 = vmatpush.bf16.msra.mxu0 %v275
  %295 = vmatpush.bf16.msra.mxu0 %v274
  %296 = vmatpush.bf16.msra.mxu0 %v273
  %297 = vmatmul.bf16.gmra.mxu0 %v217
  %v298 = vpop.f32.mrf.mxu0
  %v299 = vadd.f32 0.0, %v298
  %v300 = vpop.f32.mrf.mxu0
  %v301 = vadd.f32 0.0, %v300
  %302 = vmatmul.bf16.gmra.mxu0 %v218
  %v303 = vpop.f32.mrf.mxu0
  %v304 = vadd.f32 0.0, %v303
  %v305 = vpop.f32.mrf.mxu0
  %v306 = vadd.f32 0.0, %v305
  %307 = vmatmul.bf16.gmra.mxu0 %v219
  %v308 = vpop.f32.mrf.mxu0
  %v309 = vadd.f32 0.0, %v308
  %v310 = vpop.f32.mrf.mxu0
  %v311 = vadd.f32 0.0, %v310
  %312 = vmatmul.bf16.gmra.mxu0 %v220
  %v313 = vpop.f32.mrf.mxu0
  %v314 = vadd.f32 0.0, %v313
  %v315 = vpop.f32.mrf.mxu0
  %v316 = vadd.f32 0.0, %v315
  %317 = vmatmul.bf16.gmra.mxu0 %v221
  %v318 = vpop.f32.mrf.mxu0
  %v319 = vadd.f32 0.0, %v318
  %v320 = vpop.f32.mrf.mxu0
  %v321 = vadd.f32 0.0, %v320
  %322 = vmatmul.bf16.gmra.mxu0 %v222
  %v323 = vpop.f32.mrf.mxu0
  %v324 = vadd.f32 0.0, %v323
  %v325 = vpop.f32.mrf.mxu0
  %v326 = vadd.f32 0.0, %v325
  %327 = vmatmul.bf16.gmra.mxu0 %v223
  %v328 = vpop.f32.mrf.mxu0
  %v329 = vadd.f32 0.0, %v328
  %v330 = vpop.f32.mrf.mxu0
  %v331 = vadd.f32 0.0, %v330
  %332 = vmatmul.bf16.gmra.mxu0 %v224
  %v333 = vpop.f32.mrf.mxu0
  %v334 = vadd.f32 0.0, %v333
  %v335 = vpop.f32.mrf.mxu0
  %v336 = vadd.f32 0.0, %v335
  %337 = vdwg.mxu0
  %v338 = vpack.c.bf16 %v301, %v299
  %v339 = vpack.c.bf16 %v306, %v304
  %v340 = vpack.c.bf16 %v311, %v309
  %v341 = vpack.c.bf16 %v316, %v314
  %v342 = vpack.c.bf16 %v321, %v319
  %v343 = vpack.c.bf16 %v326, %v324
  %v344 = vpack.c.bf16 %v331, %v329
  %v345 = vpack.c.bf16 %v336, %v334
  %v346 = vld [vmem:[%s4] sm:$0x1]
  %v348 = vperm.slane %v346, 0
  %350 = vmatpush.bf16.msra.mxu0 %v345
  %351 = vmatpush.bf16.msra.mxu0 %v344
  %352 = vmatpush.bf16.msra.mxu0 %v343
  %353 = vmatpush.bf16.msra.mxu0 %v342
  %354 = vmatpush.bf16.msra.mxu0 %v341
  %355 = vmatpush.bf16.msra.mxu0 %v340
  %356 = vmatpush.bf16.msra.mxu0 %v339
  %357 = vmatpush.bf16.msra.mxu0 %v338
  %358 = vmatmul.bf16.gmra.mxu0 %v88
  %v359 = vpop.f32.mrf.mxu0
  %v360 = vadd.f32 %v348, %v359
  %v361 = vpop.f32.mrf.mxu0
  %v362 = vadd.f32 %v348, %v361
  %363 = vmatmul.bf16.gmra.mxu0 %v89
  %v364 = vpop.f32.mrf.mxu0
  %v365 = vadd.f32 %v348, %v364
  %v366 = vpop.f32.mrf.mxu0
  %v367 = vadd.f32 %v348, %v366
  %368 = vmatmul.bf16.gmra.mxu0 %v90
  %v369 = vpop.f32.mrf.mxu0
  %v370 = vadd.f32 %v348, %v369
  %v371 = vpop.f32.mrf.mxu0
  %v372 = vadd.f32 %v348, %v371
  %373 = vmatmul.bf16.gmra.mxu0 %v91
  %v374 = vpop.f32.mrf.mxu0
  %v375 = vadd.f32 %v348, %v374
  %v376 = vpop.f32.mrf.mxu0
  %v377 = vadd.f32 %v348, %v376
  %378 = vmatmul.bf16.gmra.mxu0 %v92
  %v379 = vpop.f32.mrf.mxu0
  %v380 = vadd.f32 %v348, %v379
  %v381 = vpop.f32.mrf.mxu0
  %v382 = vadd.f32 %v348, %v381
  %383 = vmatmul.bf16.gmra.mxu0 %v93
  %v384 = vpop.f32.mrf.mxu0
  %v385 = vadd.f32 %v348, %v384
  %v386 = vpop.f32.mrf.mxu0
  %v387 = vadd.f32 %v348, %v386
  %388 = vmatmul.bf16.gmra.mxu0 %v94
  %v389 = vpop.f32.mrf.mxu0
  %v390 = vadd.f32 %v348, %v389
  %v391 = vpop.f32.mrf.mxu0
  %v392 = vadd.f32 %v348, %v391
  %393 = vmatmul.bf16.gmra.mxu0 %v95
  %v394 = vpop.f32.mrf.mxu0
  %v395 = vadd.f32 %v348, %v394
  %v396 = vpop.f32.mrf.mxu0
  %v397 = vadd.f32 %v348, %v396
  %398 = vdwg.mxu0
  %399 = vst [vmem:[%s5] sm:$0xff] %v360
  %400 = vst [vmem:[%s5 + $0x8] sm:$0xff] %v362
  %401 = vst [vmem:[%s5 + $0x10] sm:$0xff] %v365
  %402 = vst [vmem:[%s5 + $0x18] sm:$0xff] %v367
  %403 = vst [vmem:[%s5 + $0x20] sm:$0xff] %v370
  %404 = vst [vmem:[%s5 + $0x28] sm:$0xff] %v372
  %405 = vst [vmem:[%s5 + $0x30] sm:$0xff] %v375
  %406 = vst [vmem:[%s5 + $0x38] sm:$0xff] %v377
  %407 = vst [vmem:[%s5 + $0x40] sm:$0xff] %v380
  %408 = vst [vmem:[%s5 + $0x48] sm:$0xff] %v382
  %409 = vst [vmem:[%s5 + $0x50] sm:$0xff] %v385
  %410 = vst [vmem:[%s5 + $0x58] sm:$0xff] %v387
  %411 = vst [vmem:[%s5 + $0x60] sm:$0xff] %v390
  %412 = vst [vmem:[%s5 + $0x68] sm:$0xff] %v392
  %413 = vst [vmem:[%s5 + $0x70] sm:$0xff] %v395
  %414 = vst [vmem:[%s5 + $0x78] sm:$0xff] %v397
  // Predicated region
  $region22: #{gcn_forward.1} parent=0 // pred_check
    _
  $region23: #{gcn_forward.1} parent=0 // pred_check_branch
    %416 = sbr.rel (0) target = $region25
  $region24: #{gcn_forward.1} parent=0 // pred_region
    _
  $region25: #{gcn_forward.1} parent=0 // pred_fallthru
    _
  // Predicated region
  $region26: #{gcn_forward.1} parent=0 // pred_check
    _
  $region27: #{gcn_forward.1} parent=0 // pred_check_branch
    %418 = sbr.rel (0) target = $region29
  $region28: #{gcn_forward.1} parent=0 // pred_region
    _
  $region29: #{gcn_forward.1} parent=0 // pred_fallthru
    _

</llo_original>
